<compile_context>
chip_gen: v7x
topology: tpu7x:2x2x1
jax: 0.10.0
libtpu: 0.0.40
codegen_flags: <defaults>
</compile_context>

<pallas_src>
import jax
import jax.numpy as jnp
from jax import lax
from jax.experimental import pallas as pl
from jax.experimental.pallas import tpu as pltpu

EPS = 1e-5


# --------------------------------------------------------------------------
# Kernel
# --------------------------------------------------------------------------
def sublayer_connection_kernel(g_ref, x_ref, w_ref, b_ref, o_ref, y_ref):
    # g_ref : (1,)      ScaleNorm gain, SMEM
    # x_ref : (tm, Dp)  full-width row tile of the input (original dtype), revisited over j
    # w_ref : (Dp, tn)  bf16 column tile of the Linear weight (for y @ W)
    # b_ref : (1, tn)   f32 bias tile
    # o_ref : (tm, tn)  output tile (lane-dense, tn % 128 == 0)
    # y_ref : (tm, Dp)  bf16 scratch holding the normalized activations (cached over j)
    j = pl.program_id(1)
    tn = o_ref.shape[-1]

    # ScaleNorm is computed once per row tile (j == 0) and cached for j > 0.
    @pl.when(j == 0)
    def _():
        x = x_ref[...].astype(jnp.float32)                   # f32 statistics
        g = g_ref[0]
        # x * g / max(||x||_2, eps)  ==  x * g * rsqrt(max(sumsq, eps^2))
        sumsq = jnp.sum(x * x, axis=-1, keepdims=True)
        inv = g * lax.rsqrt(jnp.maximum(sumsq, EPS * EPS))   # EUP rsqrt, no sqrt+div
        y_ref[...] = (x * inv).astype(jnp.bfloat16)          # bf16 into the MXU

    # sublayer = Linear(D, D); bf16 x bf16 -> f32 accumulate on the MXU
    z = jnp.dot(y_ref[...], w_ref[...], preferred_element_type=jnp.float32)
    z = z + b_ref[...]

    # dropout in eval mode == identity
    # TODO(synk): training-mode dropout would use pltpu.prng_random_bits + mask.

    # residual uses the ORIGINAL (un-normalized) x at this column tile
    col = pl.multiple_of(j * tn, 128)
    x_res = x_ref[:, pl.ds(col, tn)].astype(jnp.float32)
    o_ref[...] = (x_res + z).astype(o_ref.dtype)


# --------------------------------------------------------------------------
# Tiling / device helpers
# --------------------------------------------------------------------------
def _round_up(v: int, m: int) -> int:
    return ((v + m - 1) // m) * m


def _vmem_capacity_bytes() -> int:
    try:
        return int(pltpu.get_tpu_info().vmem_capacity_bytes)
    except Exception:
        return 64 << 20  # conservative (v7x per-TC VMEM)


def _pick_tn(dp: int, cap: int) -> int:
    if dp <= cap:
        return dp
    for cand in (1024, 768, 512, 384, 256, 128):
        if cand <= cap and dp % cand == 0:
            return cand
    return 128  # dp is always a multiple of 128


def _pick_tiles(M, Dp, x_bytes, vmem_cap, tm_override=None, tn_cap_override=None):
    big_vmem = vmem_cap >= (100 << 20)               # v5e / v6e (128 MiB) vs v7x (64 MiB)
    if tm_override is not None:
        tm = tm_override
    else:
        tm = 512 if big_vmem else (128 if Dp >= 8192 else 256)
    if tn_cap_override is not None:
        tn_cap = tn_cap_override
    else:
        tn_cap = 1024 if big_vmem else (256 if Dp >= 8192 else 512)

    tm = max(8, min(_round_up(tm, 8), _round_up(M, 8)))
    tn = _pick_tn(Dp, tn_cap)

    # Keep the double-buffered footprint + scratch under ~70% of VMEM.
    def footprint(tm_, tn_):
        dbl = 2 * (tm_ * Dp * x_bytes      # x row tile
                   + Dp * tn_ * 2          # bf16 weight tile
                   + tm_ * tn_ * x_bytes   # output tile
                   + tn_ * 4)              # bias tile
        return dbl + tm_ * Dp * 2          # bf16 y scratch (single-buffered)

    budget = int(vmem_cap * 0.70)
    while tm > 8 and footprint(tm, tn) > budget:
        tm = max(8, _round_up(tm // 2, 8))
    while tn > 128 and Dp % (tn // 2) == 0 and footprint(tm, tn) > budget:
        tn //= 2
    return tm, tn, footprint(tm, tn)


# --------------------------------------------------------------------------
# Parameter preparation (once, at setup time) and forward wrapper
# --------------------------------------------------------------------------
def prepare_params(w, b, g):
    """Pad the Linear(D, D) params to a 128-multiple and cast W to bf16 ONCE.

    Returns (w_p [Dp,Dp] bf16, b_p [1,Dp] f32, g_s [1] f32). Cache these in the
    parameter pytree; do not call per forward step.
    """
    D = w.shape[0]
    Dp = _round_up(D, 128)
    if Dp != D:
        w_p = jnp.pad(w, ((0, Dp - D), (0, Dp - D)))
        b_p = jnp.pad(b, (0, Dp - D))
    else:
        w_p, b_p = w, b
    return (w_p.astype(jnp.bfloat16),
            b_p.reshape(1, Dp).astype(jnp.float32),
            jnp.asarray(g, jnp.float32).reshape(1))


def sublayer_connection(x, w_p, b_p, g_s, *, tm=None, tn_cap=None):
    """x: [B, S, D]; w_p: [Dp, Dp] bf16 (pre-padded, for y @ w); b_p: [1, Dp] f32; g_s: [1] f32."""
    B, S, D = x.shape
    M = B * S
    Dp = w_p.shape[0]
    assert w_p.shape == (Dp, Dp) and b_p.shape == (1, Dp) and Dp >= D

    x_bytes = jnp.dtype(x.dtype).itemsize
    vmem_cap = _vmem_capacity_bytes()
    tm_, tn, fp = _pick_tiles(M, Dp, x_bytes, vmem_cap, tm, tn_cap)
    grid_m = pl.cdiv(M, tm_)        # ragged row tail handled by Pallas masking
    grid_n = Dp // tn

    x2 = x.reshape(M, D)
    if Dp != D:
        # Column zero-pad only when D is not lane-dense (zeros cannot perturb sumsq).
        x2 = jnp.pad(x2, ((0, 0), (0, Dp - D)))

    vmem_limit = max(16 << 20, int(fp * 1.3) + (2 << 20))
    vmem_limit = min(vmem_limit, int(vmem_cap * 0.75))

    out = pl.pallas_call(
        sublayer_connection_kernel,
        out_shape=jax.ShapeDtypeStruct((M, Dp), x.dtype),
        grid_spec=pltpu.PrefetchScalarGridSpec(
            num_scalar_prefetch=0,
            grid=(grid_m, grid_n),
            in_specs=[
                pl.BlockSpec(memory_space=pltpu.MemorySpace.SMEM),   # g (scalar)
                pl.BlockSpec((tm_, Dp), lambda i, j: (i, 0)),        # x rows (full width, revisit over j)
                pl.BlockSpec((Dp, tn), lambda i, j: (0, j)),         # weight column tile
                pl.BlockSpec((1, tn), lambda i, j: (0, j)),          # bias tile
            ],
            out_specs=pl.BlockSpec((tm_, tn), lambda i, j: (i, j)),
            scratch_shapes=[pltpu.VMEM((tm_, Dp), jnp.bfloat16)],    # cached normalized y
        ),
        compiler_params=pltpu.CompilerParams(
            # row tiles shard across TensorCores; column axis sequential so the
            # cached normalization (and the revisited x block) is valid.
            dimension_semantics=("parallel", "arbitrary"),
            vmem_limit_bytes=vmem_limit,
        ),
    )(g_s, x2, w_p, b_p)

    if Dp != D:
        out = out[:, :D]
    return out.reshape(B, S, D)


# --------------------------------------------------------------------------
# Pure-JAX reference (matches the PyTorch module in eval mode)
# --------------------------------------------------------------------------
def reference(x, w, b, g):
    xf = x.astype(jnp.float32)
    norm = jnp.sqrt(jnp.sum(xf * xf, axis=-1, keepdims=True))
    y = xf * (g[0] / jnp.maximum(norm, EPS))
    z = y @ w.astype(jnp.float32) + b.astype(jnp.float32)
    return (xf + z).astype(x.dtype)


if __name__ == "__main__":
    key = jax.random.PRNGKey(0)

    def run_case(B, S, D, tm=None, tn_cap=None):
        kx, kw, kb = jax.random.split(jax.random.fold_in(key, D), 3)
        x = jax.random.normal(kx, (B, S, D), dtype=jnp.float32)
        # Deterministic "sublayer" Linear params (uniform +/- 1/sqrt(D), PyTorch-like init)
        bound = 1.0 / (D ** 0.5)
        w = jax.random.uniform(kw, (D, D), dtype=jnp.float32, minval=-bound, maxval=bound)
        b = jax.random.uniform(kb, (D,), dtype=jnp.float32, minval=-bound, maxval=bound)
        # ScaleNorm gain initialized to embed_dim ** 0.5
        g = jnp.array([D ** 0.5], dtype=jnp.float32)

        w_p, b_p, g_s = prepare_params(w, b, g)          # one-time pad + bf16 cast
        out = sublayer_connection(x, w_p, b_p, g_s, tm=tm, tn_cap=tn_cap)
        jax.block_until_ready(out)

        ref = reference(x, w, b, g)
        assert out.shape == ref.shape
        # bf16 MXU path vs f32 reference -> bf16-level tolerance
        assert jnp.allclose(out, ref, atol=3e-2, rtol=3e-2), f"mismatch B={B} S={S} D={D}"

    # Small spec-consistent case (D=32 exercises the column-padding path).
    run_case(2, 8, 32)
    # Multi-tile case: ragged row tail (M=300 with tm=128 -> grid_m=3) and
    # grid_n=2 (D=256 with tn=128), exercising the cached-y reuse across column
    # tiles and the dynamic residual column slice.
    run_case(2, 150, 256, tm=128, tn_cap=128)

    print("KERNEL_OK")
</pallas_src>

<mosaic_0001>
module attributes {stable_mosaic.version = 11 : i64} {
  func.func @sublayer_connection_kernel(%arg0: i32, %arg1: i32, %arg2: memref<1xf32, #tpu.memory_space<smem>>, %arg3: memref<16x128xf32, #tpu.memory_space<vmem>>, %arg4: memref<128x128xbf16, #tpu.memory_space<vmem>>, %arg5: memref<1x128xf32, #tpu.memory_space<vmem>>, %arg6: memref<16x128xf32, #tpu.memory_space<vmem>>, %arg7: memref<16x128xbf16, #tpu.memory_space<vmem>>) attributes {dimension_semantics = [#tpu.dimension_semantics<parallel>, #tpu.dimension_semantics<arbitrary>], iteration_bounds = array<i64: 1, 1>, scalar_prefetch = 0 : i64, scratch_operands = 1 : i64, tpu.core_type = #tpu.core_type<tc>, window_params = [{transform_indices = @transform_0, window_bounds = array<i64: 1>}, {transform_indices = @transform_1, window_bounds = array<i64: 16, 128>}, {transform_indices = @transform_2, window_bounds = array<i64: 128, 128>}, {transform_indices = @transform_3, window_bounds = array<i64: 1, 128>}, {transform_indices = @transform_4, window_bounds = array<i64: 16, 128>}]} {
    %c0_i32 = arith.constant 0 : i32
    %0 = arith.cmpi eq, %arg1, %c0_i32 : i32
    %1 = arith.extui %0 : i1 to i32
    %c0_i32_0 = arith.constant 0 : i32
    %2 = arith.cmpi ne, %1, %c0_i32_0 : i32
    scf.if %2 {
      %c0_9 = arith.constant 0 : index
      %c0_10 = arith.constant 0 : index
      %15 = vector.load %arg3[%c0_9, %c0_10] : memref<16x128xf32, #tpu.memory_space<vmem>>, vector<16x128xf32>
      %c0_11 = arith.constant 0 : index
      %16 = memref.load %arg2[%c0_11] : memref<1xf32, #tpu.memory_space<smem>>
      %17 = arith.mulf %15, %15 : vector<16x128xf32>
      %cst_12 = arith.constant dense<0.000000e+00> : vector<16xf32>
      %18 = vector.multi_reduction <add>, %17, %cst_12 [1] : vector<16x128xf32> to vector<16xf32>
      %19 = vector.shape_cast %18 : vector<16xf32> to vector<16x1xf32>
      %cst_13 = arith.constant 1.000000e-10 : f32
      %20 = vector.broadcast %cst_13 : f32 to vector<16x1xf32>
      %21 = arith.maximumf %19, %20 : vector<16x1xf32>
      %22 = math.rsqrt %21 : vector<16x1xf32>
      %23 = vector.broadcast %16 : f32 to vector<16x1xf32>
      %24 = arith.mulf %23, %22 : vector<16x1xf32>
      %25 = vector.broadcast %24 : vector<16x1xf32> to vector<16x128xf32>
      %26 = arith.mulf %15, %25 : vector<16x128xf32>
      %27 = arith.truncf %26 : vector<16x128xf32> to vector<16x128xbf16>
      %c0_14 = arith.constant 0 : index
      %c0_15 = arith.constant 0 : index
      %28 = vector.load %arg7[%c0_14, %c0_15] : memref<16x128xbf16, #tpu.memory_space<vmem>>, vector<16x128xbf16>
      tpu.vector_store %arg7[%c0_14, %c0_15], %27 {strides = array<i32>} : memref<16x128xbf16, #tpu.memory_space<vmem>>, vector<16x128xbf16>,
    } else {
    }
    %c0 = arith.constant 0 : index
    %c0_1 = arith.constant 0 : index
    %3 = vector.load %arg7[%c0, %c0_1] : memref<16x128xbf16, #tpu.memory_space<vmem>>, vector<16x128xbf16>
    %c0_2 = arith.constant 0 : index
    %c0_3 = arith.constant 0 : index
    %4 = vector.load %arg4[%c0_2, %c0_3] : memref<128x128xbf16, #tpu.memory_space<vmem>>, vector<128x128xbf16>
    %cst = arith.constant dense<0.000000e+00> : vector<16x128xf32>
    %5 = tpu.matmul %3, %4, %cst {dimension_numbers = #tpu.dot_dimension_numbers<[1], [0], [0], [1], [0, 0, 1, 1], [], []>} : vector<16x128xbf16>, vector<128x128xbf16>, vector<16x128xf32> -> vector<16x128xf32>
    %c0_4 = arith.constant 0 : index
    %c0_5 = arith.constant 0 : index
    %6 = vector.load %arg5[%c0_4, %c0_5] : memref<1x128xf32, #tpu.memory_space<vmem>>, vector<1x128xf32>
    %7 = vector.broadcast %6 : vector<1x128xf32> to vector<16x128xf32>
    %8 = arith.addf %5, %7 : vector<16x128xf32>
    %c128_i32 = arith.constant 128 : i32
    %9 = arith.muli %arg1, %c128_i32 : i32
    %10 = tpu.assume_multiple %9, 128 : i32
    %c0_6 = arith.constant 0 : index
    %11 = arith.index_cast %10 : i32 to index
    %12 = vector.load %arg3[%c0_6, %11] : memref<16x128xf32, #tpu.memory_space<vmem>>, vector<16x128xf32>
    %13 = arith.addf %12, %8 : vector<16x128xf32>
    %c0_7 = arith.constant 0 : index
    %c0_8 = arith.constant 0 : index
    %14 = vector.load %arg6[%c0_7, %c0_8] : memref<16x128xf32, #tpu.memory_space<vmem>>, vector<16x128xf32>
    tpu.vector_store %arg6[%c0_7, %c0_8], %13 {strides = array<i32>} : memref<16x128xf32, #tpu.memory_space<vmem>>, vector<16x128xf32>,
    return
  }
  func.func @transform_0(%arg0: i32, %arg1: i32) -> i32 {
    %c0_i32 = arith.constant 0 : i32
    %c0_i32_0 = arith.constant 0 : i32
    return %c0_i32 : i32
  }
  func.func @transform_1(%arg0: i32, %arg1: i32) -> (i32, i32) {
    %c0_i32 = arith.constant 0 : i32
    %c0_i32_0 = arith.constant 0 : i32
    return %arg0, %c0_i32 : i32, i32
  }
  func.func @transform_2(%arg0: i32, %arg1: i32) -> (i32, i32) {
    %c0_i32 = arith.constant 0 : i32
    %c0_i32_0 = arith.constant 0 : i32
    return %c0_i32, %arg1 : i32, i32
  }
  func.func @transform_3(%arg0: i32, %arg1: i32) -> (i32, i32) {
    %c0_i32 = arith.constant 0 : i32
    %c0_i32_0 = arith.constant 0 : i32
    return %c0_i32, %arg1 : i32, i32
  }
  func.func @transform_4(%arg0: i32, %arg1: i32) -> (i32, i32) {
    %c0_i32 = arith.constant 0 : i32
    return %arg0, %arg1 : i32, i32
  }
}

</mosaic_0001>

<llo_original>
// kernel: tpu_custom_call.1
$region0: #{tpu_custom_call.1}
  #allocation0 [shape = 'u32[]', space=smem, size = 0x4, offset = 0x4, fixed_abs, tag = 'smem constant byte address 0x4 - core index']
  #allocation1 [shape = 'u32[144,128]{1,0:T(1,128)}', space=vmem, size = 0x12000, scoped, tag = 'internal scratch']
  #allocation2 [shape = 'bf16[16,128]{1,0:T(16,128)(2,1)}', space=vmem, size = 0x1000, scoped, tag = 'scratch operand']
  #allocation3 [shape = 'f32[1]{0:T(128)S(6)}', space=smem, size = 0x200, scoped, tag = 'scoped memory for tpu_custom_call.1']
  %s0 = inlined_call_operand.<no memory space> [shape: f32[1], index: 0, kind: input, shape index: {}]
  %s1 = inlined_call_operand.hbm [shape: f32[16,128], index: 1, kind: input, shape index: {}]
  %s2 = inlined_call_operand.hbm [shape: bf16[128,128], index: 2, kind: input, shape index: {}]
  %s3 = inlined_call_operand.vmem [shape: f32[1,128], index: 3, kind: input, shape index: {}]
  %s4 = inlined_call_operand.hbm [shape: f32[16,128], index: 4, kind: output, shape index: {}]
  %s5 = sld [smem:[#allocation0]]
  $region38: #{tpu_custom_call.1} parent=0
    _
  %s7 = ssub.s32 1, %s5
  %s8 = scalar_select 0, %s7, %s5
  %9 = sst [smem:[#allocation3]] %s0
  $region1: #{tpu_custom_call.1} parent=0
    #allocation4 [shape = 'u8[8192]{0}', space=vmem, size = 0x2000, scoped, tag = 'input window, operand 1, single buffered']
    #allocation5 [shape = 's32[1]{0}', space=sflag, size = 0x4, scoped, tag = 'scoped memory for tpu_custom_call.1']
    #allocation6 [shape = 's32[1]{0}', space=sflag, size = 0x4, scoped, tag = 'scoped memory for tpu_custom_call.1']
    #allocation7 [shape = 'u8[32768]{0}', space=vmem, size = 0x8000, scoped, tag = 'input window, operand 2, single buffered']
    #allocation8 [shape = 's32[1]{0}', space=sflag, size = 0x4, scoped, tag = 'scoped memory for tpu_custom_call.1']
    #allocation9 [shape = 'u8[8192]{0}', space=vmem, size = 0x2000, scoped, tag = 'output window, operand 0, single buffered']
    %10 = vsyncpa [#allocation5], 0
    %11 = vsyncpa [#allocation8], 0
    %12 = vsyncpa [#allocation6], 0
    // Predicated region
    $region2: #{tpu_custom_call.1} parent=1 // pred_check
      _
    $region3: #{tpu_custom_call.1} parent=1 // pred_check_branch
      %14 = sbr.rel (0) target = $region5
    $region4: #{tpu_custom_call.1} parent=1 // pred_region
      _
    $region5: #{tpu_custom_call.1} parent=1 // pred_fallthru
      _
    // Predicated region
    $region6: #{tpu_custom_call.1} parent=1 // pred_check
      _
    $region7: #{tpu_custom_call.1} parent=1 // pred_check_branch
      %16 = sbr.rel (0) target = $region9
    $region8: #{tpu_custom_call.1} parent=1 // pred_region
      %s18 = ssub.s32 256, 256
      %19 = vsyncadd [#allocation5], %s18
      %s20 = sshll.u32 [#allocation4], 4
      %s21 = int_to_ptr.vmem [resolvable:$true] %s20
      %26 = dma.hbm_to_vmem [thread:$0]  %s1, 256, %s21, [#allocation5], 128, 128, 8
    $region9: #{tpu_custom_call.1} parent=1 // pred_fallthru
      _
    // Predicated region
    $region10: #{tpu_custom_call.1} parent=1 // pred_check
      _
    $region11: #{tpu_custom_call.1} parent=1 // pred_check_branch
      %28 = sbr.rel (0) target = $region13
    $region12: #{tpu_custom_call.1} parent=1 // pred_region
      %s30 = ssub.s32 1024, 1024
      %31 = vsyncadd [#allocation8], %s30
      %s32 = sshll.u32 [#allocation7], 4
      %s33 = int_to_ptr.vmem [resolvable:$true] %s32
      %38 = dma.hbm_to_vmem [thread:$0]  %s2, 1024, %s33, [#allocation8], 64, 64, 4
    $region13: #{tpu_custom_call.1} parent=1 // pred_fallthru
      _
    // Predicated region
    $region14: #{tpu_custom_call.1} parent=1 // pred_check
      _
    $region15: #{tpu_custom_call.1} parent=1 // pred_check_branch
      %40 = sbr.rel (0) target = $region17
    $region16: #{tpu_custom_call.1} parent=1 // pred_region
      _
    $region17: #{tpu_custom_call.1} parent=1 // pred_fallthru
      _
    // Predicated region
    $region18: #{tpu_custom_call.1} parent=1 // pred_check
      _
    $region19: #{tpu_custom_call.1} parent=1 // pred_check_branch
      %42 = sbr.rel (0) target = $region21
    $region20: #{tpu_custom_call.1} parent=1 // pred_region
      %43 = dma.done [#allocation5], 256
    $region21: #{tpu_custom_call.1} parent=1 // pred_fallthru
      _
    // Predicated region
    $region22: #{tpu_custom_call.1} parent=1 // pred_check
      _
    $region23: #{tpu_custom_call.1} parent=1 // pred_check_branch
      %45 = sbr.rel (0) target = $region25
    $region24: #{tpu_custom_call.1} parent=1 // pred_region
      %46 = dma.done [#allocation8], 1024
    $region25: #{tpu_custom_call.1} parent=1 // pred_fallthru
      _
    %p48 = scmp.eq.s32.totalorder 0, 0
    // Predicated region
    $region26: #{tpu_custom_call.1} parent=1 // pred_check
      %p49 = pneg %p48
    $region27: #{tpu_custom_call.1} parent=1 // pred_check_branch
      %51 = sbr.rel (%p49) target = $region29
    $region28: #{tpu_custom_call.1} parent=1 // pred_region
      %v52 = vld [vmem:[#allocation4] sm:$0xff]
      %v53 = vld [vmem:[#allocation4 + $0x8] sm:$0xff]
      %s54 = sld [smem:[#allocation3]]
      %v55 = vmul.f32 %v52, %v52
      %v56 = vmul.f32 %v53, %v53
      %57 = vadd.xlane.f32.xlu0 %v55
      %v58 = vpop.xlane.xlu0 %57
      %59 = vadd.xlane.f32.xlu0 %v56
      %v60 = vpop.xlane.xlu0 %59
      %v61 = vmax.f32 %v58, 1e-10
      %v62 = vmax.f32 %v60, 1e-10
      %v63 = vrsqrt.pop %v61
      %v64 = vrsqrt.pop %v62
      %v65 = vstv %s54
      %v66 = vmul.f32 %v65, %v63
      %v67 = vmul.f32 %v65, %v64
      %v68 = vmul.f32 %v52, %v66
      %v69 = vmul.f32 %v53, %v67
      %v70 = vpack.c.bf16 %v69, %v68
      %71 = vst [vmem:[#allocation2] sm:$0xff] %v70
    $region29: #{tpu_custom_call.1} parent=1 // pred_fallthru
      _
    %v72 = vld [vmem:[#allocation2] sm:$0xff]
    %v73 = vld [vmem:[#allocation7] sm:$0xf]
    %v74 = vld [vmem:[#allocation7 + $0x4] sm:$0xf]
    %v75 = vld [vmem:[#allocation7 + $0x8] sm:$0xf]
    %v76 = vld [vmem:[#allocation7 + $0xc] sm:$0xf]
    %v77 = vld [vmem:[#allocation7 + $0x10] sm:$0xf]
    %v78 = vld [vmem:[#allocation7 + $0x14] sm:$0xf]
    %v79 = vld [vmem:[#allocation7 + $0x18] sm:$0xf]
    %v80 = vld [vmem:[#allocation7 + $0x1c] sm:$0xf]
    %v81 = vld [vmem:[#allocation7 + $0x20] sm:$0xf]
    %v82 = vld [vmem:[#allocation7 + $0x24] sm:$0xf]
    %v83 = vld [vmem:[#allocation7 + $0x28] sm:$0xf]
    %v84 = vld [vmem:[#allocation7 + $0x2c] sm:$0xf]
    %v85 = vld [vmem:[#allocation7 + $0x30] sm:$0xf]
    %v86 = vld [vmem:[#allocation7 + $0x34] sm:$0xf]
    %v87 = vld [vmem:[#allocation7 + $0x38] sm:$0xf]
    %v88 = vld [vmem:[#allocation7 + $0x3c] sm:$0xf]
    %v89 = vld [vmem:[%s3] sm:$0x1]
    %v91 = vlaneseq
    %v92 = vshrl.u32 %v91, 7
    %v93 = vsub.s32 0, %v92
    %v94 = vrot.slane %v89, %v93
    %v112 = vunpack.c.l.b16 %v73
    %v113 = vunpack.c.l.b16 %v74
    %v114 = vunpack.c.l.b16 %v75
    %v115 = vunpack.c.l.b16 %v76
    %v116 = vunpack.c.l.b16 %v77
    %v117 = vunpack.c.l.b16 %v78
    %v118 = vunpack.c.l.b16 %v79
    %v119 = vunpack.c.l.b16 %v80
    %v120 = vunpack.c.l.b16 %v81
    %v121 = vunpack.c.l.b16 %v82
    %v122 = vunpack.c.l.b16 %v83
    %v123 = vunpack.c.l.b16 %v84
    %v124 = vunpack.c.l.b16 %v85
    %v125 = vunpack.c.l.b16 %v86
    %v126 = vunpack.c.l.b16 %v87
    %v127 = vunpack.c.l.b16 %v88
    %v128 = vpack.c.b16 %v113, %v112
    %v129 = vpack.c.b16 %v115, %v114
    %v130 = vpack.c.b16 %v117, %v116
    %v131 = vpack.c.b16 %v119, %v118
    %v132 = vpack.c.b16 %v121, %v120
    %v133 = vpack.c.b16 %v123, %v122
    %v134 = vpack.c.b16 %v125, %v124
    %v135 = vpack.c.b16 %v127, %v126
    %144 = vmatprep.subr.bf16.mxu0 0
    %145 = vmatpush1.bf16.msra.mxu0 %v128
    %146 = vmatprep.subr.bf16.mxu0 0
    %147 = vmatpush1.bf16.msra.mxu0 %v129
    %148 = vmatprep.subr.bf16.mxu0 0
    %149 = vmatpush1.bf16.msra.mxu0 %v130
    %150 = vmatprep.subr.bf16.mxu0 0
    %151 = vmatpush1.bf16.msra.mxu0 %v131
    %152 = vmatprep.subr.bf16.mxu0 0
    %153 = vmatpush1.bf16.msra.mxu0 %v132
    %154 = vmatprep.subr.bf16.mxu0 0
    %155 = vmatpush1.bf16.msra.mxu0 %v133
    %156 = vmatprep.subr.bf16.mxu0 0
    %157 = vmatpush1.bf16.msra.mxu0 %v134
    %158 = vmatprep.subr.bf16.mxu0 0
    %159 = vmatpush1.bf16.msra.mxu0 %v135
    %160 = vmatprep.subr.bf16.mxu0 0
    %161 = vmatpush1.bf16.msra.mxu0 0
    %162 = vmatprep.subr.bf16.mxu0 0
    %163 = vmatpush1.bf16.msra.mxu0 0
    %164 = vmatprep.subr.bf16.mxu0 0
    %165 = vmatpush1.bf16.msra.mxu0 0
    %166 = vmatprep.subr.bf16.mxu0 0
    %167 = vmatpush1.bf16.msra.mxu0 0
    %168 = vmatprep.subr.bf16.mxu0 0
    %169 = vmatpush1.bf16.msra.mxu0 0
    %170 = vmatprep.subr.bf16.mxu0 0
    %171 = vmatpush1.bf16.msra.mxu0 0
    %172 = vmatprep.subr.bf16.mxu0 0
    %173 = vmatpush1.bf16.msra.mxu0 0
    %174 = vmatprep.subr.bf16.mxu0 0
    %175 = vmatpush1.bf16.msra.mxu0 0
    %176 = vmatprep.mubr.bf16.mxu0 0
    %177 = vmatmul.mubr.bf16.gmra.mrb[0].mxu0 %v72
    %v178 = vpop.f32.mrb[0].mxu0
    %v179 = vadd.f32 %v94, %v178
    %v180 = vpop.f32.mrb[0].mxu0
    %v181 = vpop.f32.mrb[0].mxu0
    %v182 = vadd.f32 %v94, %v181
    %v183 = vpop.f32.mrb[0].mxu0
    %184 = vdwg.mxu0
    %s185 = smul.u32 0, 128
    %s186 = sshra.s32 %s185, 7
    %s187 = sand.u32 %s185, 127
    %s188 = scalar_lea.vmem [#allocation4], %s186
    %v189 = vld [vmem:[%s188] sm:$0xff]
    %v190 = vld [vmem:[%s188 + $0x8] sm:$0xff]
    %v191 = vadd.f32 %v189, %v179
    %v192 = vadd.f32 %v190, %v182
    %193 = vst [vmem:[#allocation9] sm:$0xff] %v191
    %194 = vst [vmem:[#allocation9 + $0x8] sm:$0xff] %v192
    // Predicated region
    $region30: #{tpu_custom_call.1} parent=1 // pred_check
      _
    $region31: #{tpu_custom_call.1} parent=1 // pred_check_branch
      %196 = sbr.rel (0) target = $region33
    $region32: #{tpu_custom_call.1} parent=1 // pred_region
      %s198 = ssub.s32 256, 256
      %199 = vsyncadd [#allocation6], %s198
      %s200 = sshll.u32 [#allocation9], 4
      %s201 = int_to_ptr.vmem [resolvable:$true] %s200
      %206 = dma.vmem_to_hbm [thread:$0]  %s201, 256, %s4, [#allocation6], 128, 128, 8
    $region33: #{tpu_custom_call.1} parent=1 // pred_fallthru
      _
    // Predicated region
    $region34: #{tpu_custom_call.1} parent=1 // pred_check
      _
    $region35: #{tpu_custom_call.1} parent=1 // pred_check_branch
      %208 = sbr.rel (0) target = $region37
    $region36: #{tpu_custom_call.1} parent=1 // pred_region
      %209 = dma.done [#allocation6], 256
    $region37: #{tpu_custom_call.1} parent=1 // pred_fallthru
      _
    %210 = vsyncpa [#allocation5], 1
    %211 = vsyncpa [#allocation8], 1
    %212 = vsyncpa [#allocation6], 1

</llo_original>
